<compile_context>
chip_gen: v5e
topology: v5e:2x2
jax: 0.10.0
libtpu: 0.0.40
codegen_flags: <defaults>
</compile_context>

<pallas_src>
import functools

import jax
import jax.numpy as jnp
from jax.experimental import pallas as pl
from jax.experimental.pallas import tpu as pltpu


LANE = 128
T_HW_DEFAULT = 512  # spatial (lane-axis) tile; clamped to the actual map size


def _round_up(x, m):
    return ((x + m - 1) // m) * m


# ----------------------------------------------------------------------------
# Fused Pallas kernels
# ----------------------------------------------------------------------------
def _bottleneck_kernel_conv_sc(x_ref, w1_ref, s1_ref, b1_ref, s2_ref, b2_ref,
                               w3_ref, s3_ref, b3_ref, ws_ref, ss_ref, bs_ref,
                               o_ref):
    """Whole bottleneck for one (batch, spatial-tile) block; projection shortcut."""
    x = x_ref[0]                                   # (Cin, T) f32
    xb = x.astype(jnp.bfloat16)                    # exact (inputs bf16-representable)

    # conv1 (1x1) -> bn1 -> relu ; hight/width blocks are identity ; bn2 -> relu
    t = jnp.dot(w1_ref[...], xb, preferred_element_type=jnp.float32)
    t = jnp.maximum(t * s1_ref[...] + b1_ref[...], 0.0)
    t = jnp.maximum(t * s2_ref[...] + b2_ref[...], 0.0)

    # shortcut: conv (1x1) -> bn
    sc = jnp.dot(ws_ref[...], xb, preferred_element_type=jnp.float32)
    sc = sc * ss_ref[...] + bs_ref[...]

    # conv3 (1x1) -> bn3.  Split the f32 activation into hi/lo bf16 halves so the
    # MXU matmul keeps ~f32 accuracy without storing a rounded intermediate.
    t_hi = t.astype(jnp.bfloat16)
    t_lo = (t - t_hi.astype(jnp.float32)).astype(jnp.bfloat16)
    y = (jnp.dot(w3_ref[...], t_hi, preferred_element_type=jnp.float32)
         + jnp.dot(w3_ref[...], t_lo, preferred_element_type=jnp.float32))

    o_ref[0] = jnp.maximum(y * s3_ref[...] + b3_ref[...] + sc, 0.0)


def _bottleneck_kernel_identity(x_ref, w1_ref, s1_ref, b1_ref, s2_ref, b2_ref,
                                w3_ref, s3_ref, b3_ref, o_ref):
    """Whole bottleneck; identity shortcut (in_planes == expansion*planes)."""
    x = x_ref[0]                                   # (Cin, T) f32, Cin == cexp
    xb = x.astype(jnp.bfloat16)

    t = jnp.dot(w1_ref[...], xb, preferred_element_type=jnp.float32)
    t = jnp.maximum(t * s1_ref[...] + b1_ref[...], 0.0)
    t = jnp.maximum(t * s2_ref[...] + b2_ref[...], 0.0)

    t_hi = t.astype(jnp.bfloat16)
    t_lo = (t - t_hi.astype(jnp.float32)).astype(jnp.bfloat16)
    y = (jnp.dot(w3_ref[...], t_hi, preferred_element_type=jnp.float32)
         + jnp.dot(w3_ref[...], t_lo, preferred_element_type=jnp.float32))

    o_ref[0] = jnp.maximum(y * s3_ref[...] + b3_ref[...] + x, 0.0)


# ----------------------------------------------------------------------------
# Parameter construction (quaternion 1x1 conv weights + inference-mode BN)
# ----------------------------------------------------------------------------
def make_quaternion_weight(key, in_ch, out_ch, k):
    """Hamilton-product structured conv weight (Cout, Cin, k, k), bf16-rounded."""
    assert in_ch % 4 == 0 and out_ch % 4 == 0
    oq, iq = out_ch // 4, in_ch // 4
    shape = (oq, iq, k, k)
    std = 1.0 / float(iq * k * k) ** 0.5
    kr, ki, kj, kk = jax.random.split(key, 4)
    r = jax.random.normal(kr, shape) * std
    i = jax.random.normal(ki, shape) * std
    j = jax.random.normal(kj, shape) * std
    q = jax.random.normal(kk, shape) * std
    row_r = jnp.concatenate([r, -i, -j, -q], axis=1)
    row_i = jnp.concatenate([i,  r, -q,  j], axis=1)
    row_j = jnp.concatenate([j,  q,  r, -i], axis=1)
    row_k = jnp.concatenate([q, -j,  i,  r], axis=1)
    w = jnp.concatenate([row_r, row_i, row_j, row_k], axis=0)
    # Round to bf16-representable values so kernel (bf16 MXU) and f32 reference
    # share identical operand values.
    return w.astype(jnp.bfloat16).astype(jnp.float32)


def make_bn_params(key, c, eps=1e-5):
    """Inference-mode BN folded to per-channel (scale, bias), f32, shape (c,)."""
    kg, kb, km, kv = jax.random.split(key, 4)
    gamma = 1.0 + 0.1 * jax.random.normal(kg, (c,))
    beta = 0.1 * jax.random.normal(kb, (c,))
    mean = 0.1 * jax.random.normal(km, (c,))
    var = 1.0 + 0.1 * jnp.abs(jax.random.normal(kv, (c,)))
    scale = gamma / jnp.sqrt(var + eps)
    bias = beta - mean * scale
    return scale.astype(jnp.float32), bias.astype(jnp.float32)


def init_bottleneck(key, in_planes, planes, stride=1, expansion=4):
    ks = jax.random.split(key, 8)
    cexp = expansion * planes
    params = {
        "w1": make_quaternion_weight(ks[0], in_planes, planes, 1),
        "bn1": make_bn_params(ks[1], planes),
        "bn2": make_bn_params(ks[2], planes),
        "w3": make_quaternion_weight(ks[3], planes, cexp, 1),
        "bn3": make_bn_params(ks[4], cexp),
    }
    if stride != 1 or in_planes != cexp:
        params["ws"] = make_quaternion_weight(ks[5], in_planes, cexp, 1)
        params["bns"] = make_bn_params(ks[6], cexp)
    return params


# ----------------------------------------------------------------------------
# Bottleneck forward (NCHW in / NCHW out, like PyTorch)
# ----------------------------------------------------------------------------
def bottleneck_forward(x_nchw, params, in_planes, planes, stride=1,
                       expansion=4, t_hw=T_HW_DEFAULT):
    assert stride == 1  # see TODO(synk) at top of file
    cexp = expansion * planes
    N, C, H, W = x_nchw.shape
    assert C == in_planes
    HW = H * W

    # NCHW used directly: 1x1 conv == (Cout,Cin) @ (Cin, H*W) per image; the only
    # layout op is a free reshape of the contiguous NCHW buffer.
    x3 = x_nchw.astype(jnp.float32).reshape(N, C, HW)

    # Spatial (lane-axis) tiling: multiple of 128, capped at t_hw.
    t_hw = min(t_hw, _round_up(HW, LANE))
    HWp = _round_up(HW, t_hw)
    if HWp != HW:
        x3 = jnp.pad(x3, ((0, 0), (0, 0), (0, HWp - HW)))
    grid = (N, HWp // t_hw)

    def col(v):  # per-channel vector -> (C, 1) f32 column for lane broadcast
        return v.reshape(-1, 1).astype(jnp.float32)

    # Raw (unfolded) quaternion weights as bf16 MXU operands; BN stays f32.
    w1 = params["w1"][:, :, 0, 0].astype(jnp.bfloat16)        # (planes, Cin)
    w3 = params["w3"][:, :, 0, 0].astype(jnp.bfloat16)        # (cexp, planes)
    s1, b1 = map(col, params["bn1"])
    s2, b2 = map(col, params["bn2"])
    s3, b3 = map(col, params["bn3"])

    def const_spec(a):  # whole array resident; block index never changes
        return pl.BlockSpec(a.shape, lambda n, j, nd=a.ndim: (0,) * nd)

    x_spec = pl.BlockSpec((1, in_planes, t_hw), lambda n, j: (n, 0, j))
    o_spec = pl.BlockSpec((1, cexp, t_hw), lambda n, j: (n, 0, j))

    cparams = pltpu.CompilerParams(
        dimension_semantics=("parallel", "parallel"),
        vmem_limit_bytes=48 * 1024 * 1024,   # fits v7x's 64 MiB VMEM with headroom
    )

    if "ws" in params:
        ws = params["ws"][:, :, 0, 0].astype(jnp.bfloat16)    # (cexp, Cin)
        ss, bs = map(col, params["bns"])
        kernel = _bottleneck_kernel_conv_sc
        operands = (x3, w1, s1, b1, s2, b2, w3, s3, b3, ws, ss, bs)
    else:
        assert in_planes == cexp
        kernel = _bottleneck_kernel_identity
        operands = (x3, w1, s1, b1, s2, b2, w3, s3, b3)

    in_specs = [x_spec] + [const_spec(a) for a in operands[1:]]

    out = pl.pallas_call(
        kernel,
        out_shape=jax.ShapeDtypeStruct((N, cexp, HWp), jnp.float32),
        grid_spec=pltpu.PrefetchScalarGridSpec(
            num_scalar_prefetch=0,
            grid=grid,
            in_specs=in_specs,
            out_specs=o_spec,
        ),
        compiler_params=cparams,
    )(*operands)

    if HWp != HW:
        out = out[:, :, :HW]
    return out.reshape(N, cexp, H, W)


# ----------------------------------------------------------------------------
# Pure-JAX f32 reference for verification
# ----------------------------------------------------------------------------
def _ref_conv1x1(x_nchw, w):
    return jax.lax.conv_general_dilated(
        x_nchw, w, window_strides=(1, 1), padding=((0, 0), (0, 0)),
        dimension_numbers=("NCHW", "OIHW", "NCHW"),
        precision=jax.lax.Precision.HIGHEST)


def _ref_bn(x_nchw, sb):
    s, b = sb
    return x_nchw * s.reshape(1, -1, 1, 1) + b.reshape(1, -1, 1, 1)


def bottleneck_reference(x_nchw, params):
    out = jax.nn.relu(_ref_bn(_ref_conv1x1(x_nchw, params["w1"]), params["bn1"]))
    # hight_block / width_block treated as identity (undefined in source)
    out = jax.nn.relu(_ref_bn(out, params["bn2"]))
    out = _ref_bn(_ref_conv1x1(out, params["w3"]), params["bn3"])
    if "ws" in params:
        sc = _ref_bn(_ref_conv1x1(x_nchw, params["ws"]), params["bns"])
    else:
        sc = x_nchw
    return jax.nn.relu(out + sc)


# ----------------------------------------------------------------------------
if __name__ == "__main__":
    key = jax.random.PRNGKey(0)
    kx1, kp1, kx2, kp2 = jax.random.split(key, 4)

    # Case 1: projection shortcut (in_planes != expansion*planes).
    N, in_planes, H, W = 2, 32, 16, 16
    planes = 16
    x = jax.random.normal(kx1, (N, in_planes, H, W), dtype=jnp.float32)
    x = x.astype(jnp.bfloat16).astype(jnp.float32)      # bf16-representable inputs
    params = init_bottleneck(kp1, in_planes, planes, stride=1)

    fwd = jax.jit(functools.partial(
        bottleneck_forward, in_planes=in_planes, planes=planes, stride=1))
    out = jax.block_until_ready(fwd(x, params))
    ref = jax.block_until_ready(bottleneck_reference(x, params))

    assert out.shape == (N, 4 * planes, H, W), out.shape
    err = float(jnp.max(jnp.abs(out - ref)))
    assert jnp.allclose(out, ref, rtol=1e-2, atol=1e-2), err

    # Case 2: identity shortcut (in_planes == expansion*planes).
    in_planes2, planes2 = 64, 16
    x2 = jax.random.normal(kx2, (N, in_planes2, H, W), dtype=jnp.float32)
    x2 = x2.astype(jnp.bfloat16).astype(jnp.float32)
    params2 = init_bottleneck(kp2, in_planes2, planes2, stride=1)

    fwd2 = jax.jit(functools.partial(
        bottleneck_forward, in_planes=in_planes2, planes=planes2, stride=1))
    out2 = jax.block_until_ready(fwd2(x2, params2))
    ref2 = jax.block_until_ready(bottleneck_reference(x2, params2))

    assert out2.shape == (N, 4 * planes2, H, W), out2.shape
    err2 = float(jnp.max(jnp.abs(out2 - ref2)))
    assert jnp.allclose(out2, ref2, rtol=1e-2, atol=1e-2), err2

    print("KERNEL_OK")
</pallas_src>

<mosaic_0001>
module attributes {stable_mosaic.version = 11 : i64} {
  func.func @_bottleneck_kernel_conv_sc(%arg0: i32, %arg1: i32, %arg2: memref<1x32x256xf32, #tpu.memory_space<vmem>>, %arg3: memref<16x32xbf16, #tpu.memory_space<vmem>>, %arg4: memref<16x1xf32, #tpu.memory_space<vmem>>, %arg5: memref<16x1xf32, #tpu.memory_space<vmem>>, %arg6: memref<16x1xf32, #tpu.memory_space<vmem>>, %arg7: memref<16x1xf32, #tpu.memory_space<vmem>>, %arg8: memref<64x16xbf16, #tpu.memory_space<vmem>>, %arg9: memref<64x1xf32, #tpu.memory_space<vmem>>, %arg10: memref<64x1xf32, #tpu.memory_space<vmem>>, %arg11: memref<64x32xbf16, #tpu.memory_space<vmem>>, %arg12: memref<64x1xf32, #tpu.memory_space<vmem>>, %arg13: memref<64x1xf32, #tpu.memory_space<vmem>>, %arg14: memref<1x64x256xf32, #tpu.memory_space<vmem>>) attributes {dimension_semantics = [#tpu.dimension_semantics<parallel>, #tpu.dimension_semantics<parallel>], iteration_bounds = array<i64: 2, 1>, scalar_prefetch = 0 : i64, scratch_operands = 0 : i64, tpu.core_type = #tpu.core_type<tc>, window_params = [{transform_indices = @transform_0, window_bounds = array<i64: 1, 32, 256>}, {pipeline_mode = #tpu.pipeline_mode<synchronous>, transform_indices = @transform_1, window_bounds = array<i64: 16, 32>}, {pipeline_mode = #tpu.pipeline_mode<synchronous>, transform_indices = @transform_2, window_bounds = array<i64: 16, 1>}, {pipeline_mode = #tpu.pipeline_mode<synchronous>, transform_indices = @transform_3, window_bounds = array<i64: 16, 1>}, {pipeline_mode = #tpu.pipeline_mode<synchronous>, transform_indices = @transform_4, window_bounds = array<i64: 16, 1>}, {pipeline_mode = #tpu.pipeline_mode<synchronous>, transform_indices = @transform_5, window_bounds = array<i64: 16, 1>}, {pipeline_mode = #tpu.pipeline_mode<synchronous>, transform_indices = @transform_6, window_bounds = array<i64: 64, 16>}, {pipeline_mode = #tpu.pipeline_mode<synchronous>, transform_indices = @transform_7, window_bounds = array<i64: 64, 1>}, {pipeline_mode = #tpu.pipeline_mode<synchronous>, transform_indices = @transform_8, window_bounds = array<i64: 64, 1>}, {pipeline_mode = #tpu.pipeline_mode<synchronous>, transform_indices = @transform_9, window_bounds = array<i64: 64, 32>}, {pipeline_mode = #tpu.pipeline_mode<synchronous>, transform_indices = @transform_10, window_bounds = array<i64: 64, 1>}, {pipeline_mode = #tpu.pipeline_mode<synchronous>, transform_indices = @transform_11, window_bounds = array<i64: 64, 1>}, {transform_indices = @transform_12, window_bounds = array<i64: 1, 64, 256>}]} {
    %c0 = arith.constant 0 : index
    %c0_0 = arith.constant 0 : index
    %c0_1 = arith.constant 0 : index
    %0 = vector.load %arg2[%c0, %c0_0, %c0_1] : memref<1x32x256xf32, #tpu.memory_space<vmem>>, vector<1x32x256xf32>
    %1 = vector.shape_cast %0 : vector<1x32x256xf32> to vector<32x256xf32>
    %2 = arith.truncf %1 : vector<32x256xf32> to vector<32x256xbf16>
    %c0_2 = arith.constant 0 : index
    %c0_3 = arith.constant 0 : index
    %3 = vector.load %arg3[%c0_2, %c0_3] : memref<16x32xbf16, #tpu.memory_space<vmem>>, vector<16x32xbf16>
    %cst = arith.constant dense<0.000000e+00> : vector<16x256xf32>
    %4 = tpu.matmul %3, %2, %cst {dimension_numbers = #tpu.dot_dimension_numbers<[1], [0], [0], [1], [0, 0, 1, 1], [], []>} : vector<16x32xbf16>, vector<32x256xbf16>, vector<16x256xf32> -> vector<16x256xf32>
    %c0_4 = arith.constant 0 : index
    %c0_5 = arith.constant 0 : index
    %5 = vector.load %arg4[%c0_4, %c0_5] : memref<16x1xf32, #tpu.memory_space<vmem>>, vector<16x1xf32>
    %6 = vector.broadcast %5 : vector<16x1xf32> to vector<16x256xf32>
    %7 = arith.mulf %4, %6 : vector<16x256xf32>
    %c0_6 = arith.constant 0 : index
    %c0_7 = arith.constant 0 : index
    %8 = vector.load %arg5[%c0_6, %c0_7] : memref<16x1xf32, #tpu.memory_space<vmem>>, vector<16x1xf32>
    %9 = vector.broadcast %8 : vector<16x1xf32> to vector<16x256xf32>
    %10 = arith.addf %7, %9 : vector<16x256xf32>
    %cst_8 = arith.constant 0.000000e+00 : f32
    %11 = vector.broadcast %cst_8 : f32 to vector<16x256xf32>
    %12 = arith.maximumf %10, %11 : vector<16x256xf32>
    %c0_9 = arith.constant 0 : index
    %c0_10 = arith.constant 0 : index
    %13 = vector.load %arg6[%c0_9, %c0_10] : memref<16x1xf32, #tpu.memory_space<vmem>>, vector<16x1xf32>
    %14 = vector.broadcast %13 : vector<16x1xf32> to vector<16x256xf32>
    %15 = arith.mulf %12, %14 : vector<16x256xf32>
    %c0_11 = arith.constant 0 : index
    %c0_12 = arith.constant 0 : index
    %16 = vector.load %arg7[%c0_11, %c0_12] : memref<16x1xf32, #tpu.memory_space<vmem>>, vector<16x1xf32>
    %17 = vector.broadcast %16 : vector<16x1xf32> to vector<16x256xf32>
    %18 = arith.addf %15, %17 : vector<16x256xf32>
    %cst_13 = arith.constant 0.000000e+00 : f32
    %19 = vector.broadcast %cst_13 : f32 to vector<16x256xf32>
    %20 = arith.maximumf %18, %19 : vector<16x256xf32>
    %c0_14 = arith.constant 0 : index
    %c0_15 = arith.constant 0 : index
    %21 = vector.load %arg11[%c0_14, %c0_15] : memref<64x32xbf16, #tpu.memory_space<vmem>>, vector<64x32xbf16>
    %cst_16 = arith.constant dense<0.000000e+00> : vector<64x256xf32>
    %22 = tpu.matmul %21, %2, %cst_16 {dimension_numbers = #tpu.dot_dimension_numbers<[1], [0], [0], [1], [0, 0, 1, 1], [], []>} : vector<64x32xbf16>, vector<32x256xbf16>, vector<64x256xf32> -> vector<64x256xf32>
    %c0_17 = arith.constant 0 : index
    %c0_18 = arith.constant 0 : index
    %23 = vector.load %arg12[%c0_17, %c0_18] : memref<64x1xf32, #tpu.memory_space<vmem>>, vector<64x1xf32>
    %24 = vector.broadcast %23 : vector<64x1xf32> to vector<64x256xf32>
    %25 = arith.mulf %22, %24 : vector<64x256xf32>
    %c0_19 = arith.constant 0 : index
    %c0_20 = arith.constant 0 : index
    %26 = vector.load %arg13[%c0_19, %c0_20] : memref<64x1xf32, #tpu.memory_space<vmem>>, vector<64x1xf32>
    %27 = vector.broadcast %26 : vector<64x1xf32> to vector<64x256xf32>
    %28 = arith.addf %25, %27 : vector<64x256xf32>
    %29 = arith.truncf %20 : vector<16x256xf32> to vector<16x256xbf16>
    %30 = arith.extf %29 : vector<16x256xbf16> to vector<16x256xf32>
    %31 = arith.subf %20, %30 : vector<16x256xf32>
    %32 = arith.truncf %31 : vector<16x256xf32> to vector<16x256xbf16>
    %c0_21 = arith.constant 0 : index
    %c0_22 = arith.constant 0 : index
    %33 = vector.load %arg8[%c0_21, %c0_22] : memref<64x16xbf16, #tpu.memory_space<vmem>>, vector<64x16xbf16>
    %cst_23 = arith.constant dense<0.000000e+00> : vector<64x256xf32>
    %34 = tpu.matmul %33, %29, %cst_23 {dimension_numbers = #tpu.dot_dimension_numbers<[1], [0], [0], [1], [0, 0, 1, 1], [], []>} : vector<64x16xbf16>, vector<16x256xbf16>, vector<64x256xf32> -> vector<64x256xf32>
    %c0_24 = arith.constant 0 : index
    %c0_25 = arith.constant 0 : index
    %35 = vector.load %arg8[%c0_24, %c0_25] : memref<64x16xbf16, #tpu.memory_space<vmem>>, vector<64x16xbf16>
    %cst_26 = arith.constant dense<0.000000e+00> : vector<64x256xf32>
    %36 = tpu.matmul %35, %32, %cst_26 {dimension_numbers = #tpu.dot_dimension_numbers<[1], [0], [0], [1], [0, 0, 1, 1], [], []>} : vector<64x16xbf16>, vector<16x256xbf16>, vector<64x256xf32> -> vector<64x256xf32>
    %37 = arith.addf %34, %36 : vector<64x256xf32>
    %c0_27 = arith.constant 0 : index
    %c0_28 = arith.constant 0 : index
    %38 = vector.load %arg9[%c0_27, %c0_28] : memref<64x1xf32, #tpu.memory_space<vmem>>, vector<64x1xf32>
    %39 = vector.broadcast %38 : vector<64x1xf32> to vector<64x256xf32>
    %40 = arith.mulf %37, %39 : vector<64x256xf32>
    %c0_29 = arith.constant 0 : index
    %c0_30 = arith.constant 0 : index
    %41 = vector.load %arg10[%c0_29, %c0_30] : memref<64x1xf32, #tpu.memory_space<vmem>>, vector<64x1xf32>
    %42 = vector.broadcast %41 : vector<64x1xf32> to vector<64x256xf32>
    %43 = arith.addf %40, %42 : vector<64x256xf32>
    %44 = arith.addf %43, %28 : vector<64x256xf32>
    %cst_31 = arith.constant 0.000000e+00 : f32
    %45 = vector.broadcast %cst_31 : f32 to vector<64x256xf32>
    %46 = arith.maximumf %44, %45 : vector<64x256xf32>
    %c0_32 = arith.constant 0 : index
    %c0_33 = arith.constant 0 : index
    %c0_34 = arith.constant 0 : index
    %47 = vector.load %arg14[%c0_32, %c0_33, %c0_34] : memref<1x64x256xf32, #tpu.memory_space<vmem>>, vector<1x64x256xf32>
    %48 = vector.shape_cast %47 : vector<1x64x256xf32> to vector<64x256xf32>
    %49 = vector.shape_cast %46 : vector<64x256xf32> to vector<1x64x256xf32>
    tpu.vector_store %arg14[%c0_32, %c0_33, %c0_34], %49 {strides = array<i32>} : memref<1x64x256xf32, #tpu.memory_space<vmem>>, vector<1x64x256xf32>,
    return
  }
  func.func @transform_0(%arg0: i32, %arg1: i32) -> (i32, i32, i32) {
    %c0_i32 = arith.constant 0 : i32
    %c0_i32_0 = arith.constant 0 : i32
    return %arg0, %c0_i32, %arg1 : i32, i32, i32
  }
  func.func @transform_1(%arg0: i32, %arg1: i32) -> (i32, i32) {
    %c0_i32 = arith.constant 0 : i32
    %c0_i32_0 = arith.constant 0 : i32
    %c0_i32_1 = arith.constant 0 : i32
    return %c0_i32, %c0_i32_0 : i32, i32
  }
  func.func @transform_2(%arg0: i32, %arg1: i32) -> (i32, i32) {
    %c0_i32 = arith.constant 0 : i32
    %c0_i32_0 = arith.constant 0 : i32
    %c0_i32_1 = arith.constant 0 : i32
    return %c0_i32, %c0_i32_0 : i32, i32
  }
  func.func @transform_3(%arg0: i32, %arg1: i32) -> (i32, i32) {
    %c0_i32 = arith.constant 0 : i32
    %c0_i32_0 = arith.constant 0 : i32
    %c0_i32_1 = arith.constant 0 : i32
    return %c0_i32, %c0_i32_0 : i32, i32
  }
  func.func @transform_4(%arg0: i32, %arg1: i32) -> (i32, i32) {
    %c0_i32 = arith.constant 0 : i32
    %c0_i32_0 = arith.constant 0 : i32
    %c0_i32_1 = arith.constant 0 : i32
    return %c0_i32, %c0_i32_0 : i32, i32
  }
  func.func @transform_5(%arg0: i32, %arg1: i32) -> (i32, i32) {
    %c0_i32 = arith.constant 0 : i32
    %c0_i32_0 = arith.constant 0 : i32
    %c0_i32_1 = arith.constant 0 : i32
    return %c0_i32, %c0_i32_0 : i32, i32
  }
  func.func @transform_6(%arg0: i32, %arg1: i32) -> (i32, i32) {
    %c0_i32 = arith.constant 0 : i32
    %c0_i32_0 = arith.constant 0 : i32
    %c0_i32_1 = arith.constant 0 : i32
    return %c0_i32, %c0_i32_0 : i32, i32
  }
  func.func @transform_7(%arg0: i32, %arg1: i32) -> (i32, i32) {
    %c0_i32 = arith.constant 0 : i32
    %c0_i32_0 = arith.constant 0 : i32
    %c0_i32_1 = arith.constant 0 : i32
    return %c0_i32, %c0_i32_0 : i32, i32
  }
  func.func @transform_8(%arg0: i32, %arg1: i32) -> (i32, i32) {
    %c0_i32 = arith.constant 0 : i32
    %c0_i32_0 = arith.constant 0 : i32
    %c0_i32_1 = arith.constant 0 : i32
    return %c0_i32, %c0_i32_0 : i32, i32
  }
  func.func @transform_9(%arg0: i32, %arg1: i32) -> (i32, i32) {
    %c0_i32 = arith.constant 0 : i32
    %c0_i32_0 = arith.constant 0 : i32
    %c0_i32_1 = arith.constant 0 : i32
    return %c0_i32, %c0_i32_0 : i32, i32
  }
  func.func @transform_10(%arg0: i32, %arg1: i32) -> (i32, i32) {
    %c0_i32 = arith.constant 0 : i32
    %c0_i32_0 = arith.constant 0 : i32
    %c0_i32_1 = arith.constant 0 : i32
    return %c0_i32, %c0_i32_0 : i32, i32
  }
  func.func @transform_11(%arg0: i32, %arg1: i32) -> (i32, i32) {
    %c0_i32 = arith.constant 0 : i32
    %c0_i32_0 = arith.constant 0 : i32
    %c0_i32_1 = arith.constant 0 : i32
    return %c0_i32, %c0_i32_0 : i32, i32
  }
  func.func @transform_12(%arg0: i32, %arg1: i32) -> (i32, i32, i32) {
    %c0_i32 = arith.constant 0 : i32
    %c0_i32_0 = arith.constant 0 : i32
    return %arg0, %c0_i32, %arg1 : i32, i32, i32
  }
}

</mosaic_0001>

<llo_original>
// kernel: bottleneck_forward.1
$region0: #{bottleneck_forward.1}
  #allocation0 [shape = 'u32[]', space=smem, size = 0x4, offset = 0x4, fixed_abs, tag = 'smem constant byte address 0x4 - core index']
  #allocation1 [shape = 'u32[72,128]{1,0:T(1,128)}', space=vmem, size = 0x9000, scoped, tag = 'internal scratch']
  %s0 = inlined_call_operand.vmem [shape: f32[2,32,256], index: 0, kind: input, shape index: {}]
  %s1 = inlined_call_operand.vmem [shape: bf16[16,32], index: 1, kind: input, shape index: {}]
  %s2 = inlined_call_operand.vmem [shape: f32[16,1], index: 2, kind: input, shape index: {}]
  %s3 = inlined_call_operand.vmem [shape: f32[16,1], index: 3, kind: input, shape index: {}]
  %s4 = inlined_call_operand.vmem [shape: f32[16,1], index: 4, kind: input, shape index: {}]
  %s5 = inlined_call_operand.vmem [shape: f32[16,1], index: 5, kind: input, shape index: {}]
  %s6 = inlined_call_operand.vmem [shape: bf16[64,16], index: 6, kind: input, shape index: {}]
  %s7 = inlined_call_operand.vmem [shape: f32[64,1], index: 7, kind: input, shape index: {}]
  %s8 = inlined_call_operand.vmem [shape: f32[64,1], index: 8, kind: input, shape index: {}]
  %s9 = inlined_call_operand.vmem [shape: bf16[64,32], index: 9, kind: input, shape index: {}]
  %s10 = inlined_call_operand.vmem [shape: f32[64,1], index: 10, kind: input, shape index: {}]
  %s11 = inlined_call_operand.vmem [shape: f32[64,1], index: 11, kind: input, shape index: {}]
  %s12 = inlined_call_operand.vmem [shape: f32[2,64,256], index: 12, kind: output, shape index: {}]
  %s13 = sld [smem:[#allocation0]]
  $region81: #{bottleneck_forward.1} parent=0
    _
  %s15 = ssub.s32 1, %s13
  %s16 = scalar_select 0, %s15, %s13
  loop: start=0, step=1, limit=4
  $region2: #{bottleneck_forward.1} parent=0 // loop_pre_header
    _
  $region3: #{bottleneck_forward.1} parent=0 // loop_header
    %s18 = sphi 0, %s22
    %p19 = scmp.ge.s32.totalorder %s18, 4
    %s25 = sphi 0, %s37
    %s26 = sphi 0, %s33
    %s27 = sphi 0, %s25
    %s28 = sphi 0, %s26
    %s29 = sphi 0, %s27
    %s30 = sphi 0, %s28
    %s42 = sphi 0, %s44
    %s45 = sphi 0, %s42
    %s46 = sphi 0, %s45
    %s62 = sphi 0, %s46
    %s66 = sphi 0, %s66
    %s68 = sphi 0, %s66
    %s69 = sphi 0, %s68
    %s83 = sphi 0, %s69
    %s87 = sphi 0, %s87
    %s89 = sphi 0, %s87
    %s90 = sphi 0, %s89
    %s104 = sphi 0, %s90
    %s108 = sphi 0, %s108
    %s110 = sphi 0, %s108
    %s111 = sphi 0, %s110
    %s125 = sphi 0, %s111
    %s129 = sphi 0, %s129
    %s131 = sphi 0, %s129
    %s132 = sphi 0, %s131
    %s146 = sphi 0, %s132
    %s150 = sphi 0, %s150
    %s152 = sphi 0, %s150
    %s153 = sphi 0, %s152
    %s167 = sphi 0, %s153
    %s171 = sphi 0, %s171
    %s173 = sphi 0, %s171
    %s174 = sphi 0, %s173
    %s188 = sphi 0, %s174
    %s192 = sphi 0, %s192
    %s194 = sphi 0, %s192
    %s195 = sphi 0, %s194
    %s209 = sphi 0, %s195
    %s213 = sphi 0, %s213
    %s215 = sphi 0, %s213
    %s216 = sphi 0, %s215
    %s230 = sphi 0, %s216
    %s234 = sphi 0, %s234
    %s236 = sphi 0, %s234
    %s237 = sphi 0, %s236
    %s251 = sphi 0, %s237
    %s255 = sphi 0, %s255
    %s257 = sphi 0, %s255
    %s258 = sphi 0, %s257
    %s272 = sphi 0, %s258
    %s276 = sphi 0, %s276
    %s278 = sphi 0, %s276
    %s279 = sphi 0, %s278
    %s293 = sphi 0, %s279
    %s301 = sphi 0, %s303
    %s304 = sphi 0, %s301
    %s305 = sphi 0, %s304
    %s321 = sphi 0, %s305
  $region4: #{bottleneck_forward.1} parent=0 // loop_header_branch
    %21 = sbr.rel (%p19) target = $region8
  $region5: #{bottleneck_forward.1} parent=0 // loop_body
    %s23 = ssub.s32 %s18, 1
    %s24 = ssub.s32 %s18, 2
    %s31 = sadd.s32 1, %s26
    %p32 = scmp.ge.s32.totalorder %s31, 1
    %s33 = scalar_select %p32, 0, %s31
    %s34 = sadd.s32 1, %s25
    %s35 = scalar_select %p32, %s34, %s25
    %p36 = scmp.ge.s32.totalorder %s35, 2
    %s37 = scalar_select %p36, 0, %s35
    %s38 = ssub.s32 %s25, %s37
    %s39 = ssub.s32 %s26, %s33
    %s40 = sor.u32 %s38, %s39
    %p41 = scmp.eq.s32.totalorder %s40, 0
    %s43 = sadd.s32 %s42, 1
    %s44 = scalar_select %p41, %s42, %s43
    %p47 = pneg %p41
    %p48 = scmp.eq.s32.totalorder %s18, 1
    %p49 = por %p47, %p48
    %p50 = scmp.ne.s32.totalorder %s42, %s45
    %p51 = scmp.eq.s32.totalorder %s18, 0
    %p52 = por %p50, %p51
    %p53 = scmp.ne.s32.totalorder %s42, %s45
    %p54 = scmp.eq.s32.totalorder %s23, 1
    %p55 = por %p53, %p54
    %p56 = scmp.ne.s32.totalorder %s45, %s46
    %p57 = scmp.eq.s32.totalorder %s23, 0
    %p58 = por %p56, %p57
    %p59 = scmp.ne.s32.totalorder %s45, %s46
    %p60 = scmp.eq.s32.totalorder %s24, 1
    %p61 = por %p59, %p60
    %p63 = scmp.ne.s32.totalorder %s46, %s62
    %p64 = scmp.eq.s32.totalorder %s24, 0
    %p65 = por %p63, %p64
    %s67 = sadd.s32 %s66, 1
    %p70 = scmp.eq.s32.totalorder %s18, 1
    %p71 = scmp.ne.s32.totalorder %s66, %s68
    %p72 = scmp.eq.s32.totalorder %s18, 0
    %p73 = por %p71, %p72
    %p74 = scmp.ne.s32.totalorder %s66, %s68
    %p75 = scmp.eq.s32.totalorder %s23, 1
    %p76 = por %p74, %p75
    %p77 = scmp.ne.s32.totalorder %s68, %s69
    %p78 = scmp.eq.s32.totalorder %s23, 0
    %p79 = por %p77, %p78
    %p80 = scmp.ne.s32.totalorder %s68, %s69
    %p81 = scmp.eq.s32.totalorder %s24, 1
    %p82 = por %p80, %p81
    %p84 = scmp.ne.s32.totalorder %s69, %s83
    %p85 = scmp.eq.s32.totalorder %s24, 0
    %p86 = por %p84, %p85
    %s88 = sadd.s32 %s87, 1
    %p91 = scmp.eq.s32.totalorder %s18, 1
    %p92 = scmp.ne.s32.totalorder %s87, %s89
    %p93 = scmp.eq.s32.totalorder %s18, 0
    %p94 = por %p92, %p93
    %p95 = scmp.ne.s32.totalorder %s87, %s89
    %p96 = scmp.eq.s32.totalorder %s23, 1
    %p97 = por %p95, %p96
    %p98 = scmp.ne.s32.totalorder %s89, %s90
    %p99 = scmp.eq.s32.totalorder %s23, 0
    %p100 = por %p98, %p99
    %p101 = scmp.ne.s32.totalorder %s89, %s90
    %p102 = scmp.eq.s32.totalorder %s24, 1
    %p103 = por %p101, %p102
    %p105 = scmp.ne.s32.totalorder %s90, %s104
    %p106 = scmp.eq.s32.totalorder %s24, 0
    %p107 = por %p105, %p106
    %s109 = sadd.s32 %s108, 1
    %p112 = scmp.eq.s32.totalorder %s18, 1
    %p113 = scmp.ne.s32.totalorder %s108, %s110
    %p114 = scmp.eq.s32.totalorder %s18, 0
    %p115 = por %p113, %p114
    %p116 = scmp.ne.s32.totalorder %s108, %s110
    %p117 = scmp.eq.s32.totalorder %s23, 1
    %p118 = por %p116, %p117
    %p119 = scmp.ne.s32.totalorder %s110, %s111
    %p120 = scmp.eq.s32.totalorder %s23, 0
    %p121 = por %p119, %p120
    %p122 = scmp.ne.s32.totalorder %s110, %s111
    %p123 = scmp.eq.s32.totalorder %s24, 1
    %p124 = por %p122, %p123
    %p126 = scmp.ne.s32.totalorder %s111, %s125
    %p127 = scmp.eq.s32.totalorder %s24, 0
    %p128 = por %p126, %p127
    %s130 = sadd.s32 %s129, 1
    %p133 = scmp.eq.s32.totalorder %s18, 1
    %p134 = scmp.ne.s32.totalorder %s129, %s131
    %p135 = scmp.eq.s32.totalorder %s18, 0
    %p136 = por %p134, %p135
    %p137 = scmp.ne.s32.totalorder %s129, %s131
    %p138 = scmp.eq.s32.totalorder %s23, 1
    %p139 = por %p137, %p138
    %p140 = scmp.ne.s32.totalorder %s131, %s132
    %p141 = scmp.eq.s32.totalorder %s23, 0
    %p142 = por %p140, %p141
    %p143 = scmp.ne.s32.totalorder %s131, %s132
    %p144 = scmp.eq.s32.totalorder %s24, 1
    %p145 = por %p143, %p144
    %p147 = scmp.ne.s32.totalorder %s132, %s146
    %p148 = scmp.eq.s32.totalorder %s24, 0
    %p149 = por %p147, %p148
    %s151 = sadd.s32 %s150, 1
    %p154 = scmp.eq.s32.totalorder %s18, 1
    %p155 = scmp.ne.s32.totalorder %s150, %s152
    %p156 = scmp.eq.s32.totalorder %s18, 0
    %p157 = por %p155, %p156
    %p158 = scmp.ne.s32.totalorder %s150, %s152
    %p159 = scmp.eq.s32.totalorder %s23, 1
    %p160 = por %p158, %p159
    %p161 = scmp.ne.s32.totalorder %s152, %s153
    %p162 = scmp.eq.s32.totalorder %s23, 0
    %p163 = por %p161, %p162
    %p164 = scmp.ne.s32.totalorder %s152, %s153
    %p165 = scmp.eq.s32.totalorder %s24, 1
    %p166 = por %p164, %p165
    %p168 = scmp.ne.s32.totalorder %s153, %s167
    %p169 = scmp.eq.s32.totalorder %s24, 0
    %p170 = por %p168, %p169
    %s172 = sadd.s32 %s171, 1
    %p175 = scmp.eq.s32.totalorder %s18, 1
    %p176 = scmp.ne.s32.totalorder %s171, %s173
    %p177 = scmp.eq.s32.totalorder %s18, 0
    %p178 = por %p176, %p177
    %p179 = scmp.ne.s32.totalorder %s171, %s173
    %p180 = scmp.eq.s32.totalorder %s23, 1
    %p181 = por %p179, %p180
    %p182 = scmp.ne.s32.totalorder %s173, %s174
    %p183 = scmp.eq.s32.totalorder %s23, 0
    %p184 = por %p182, %p183
    %p185 = scmp.ne.s32.totalorder %s173, %s174
    %p186 = scmp.eq.s32.totalorder %s24, 1
    %p187 = por %p185, %p186
    %p189 = scmp.ne.s32.totalorder %s174, %s188
    %p190 = scmp.eq.s32.totalorder %s24, 0
    %p191 = por %p189, %p190
    %s193 = sadd.s32 %s192, 1
    %p196 = scmp.eq.s32.totalorder %s18, 1
    %p197 = scmp.ne.s32.totalorder %s192, %s194
    %p198 = scmp.eq.s32.totalorder %s18, 0
    %p199 = por %p197, %p198
    %p200 = scmp.ne.s32.totalorder %s192, %s194
    %p201 = scmp.eq.s32.totalorder %s23, 1
    %p202 = por %p200, %p201
    %p203 = scmp.ne.s32.totalorder %s194, %s195
    %p204 = scmp.eq.s32.totalorder %s23, 0
    %p205 = por %p203, %p204
    %p206 = scmp.ne.s32.totalorder %s194, %s195
    %p207 = scmp.eq.s32.totalorder %s24, 1
    %p208 = por %p206, %p207
    %p210 = scmp.ne.s32.totalorder %s195, %s209
    %p211 = scmp.eq.s32.totalorder %s24, 0
    %p212 = por %p210, %p211
    %s214 = sadd.s32 %s213, 1
    %p217 = scmp.eq.s32.totalorder %s18, 1
    %p218 = scmp.ne.s32.totalorder %s213, %s215
    %p219 = scmp.eq.s32.totalorder %s18, 0
    %p220 = por %p218, %p219
    %p221 = scmp.ne.s32.totalorder %s213, %s215
    %p222 = scmp.eq.s32.totalorder %s23, 1
    %p223 = por %p221, %p222
    %p224 = scmp.ne.s32.totalorder %s215, %s216
    %p225 = scmp.eq.s32.totalorder %s23, 0
    %p226 = por %p224, %p225
    %p227 = scmp.ne.s32.totalorder %s215, %s216
    %p228 = scmp.eq.s32.totalorder %s24, 1
    %p229 = por %p227, %p228
    %p231 = scmp.ne.s32.totalorder %s216, %s230
    %p232 = scmp.eq.s32.totalorder %s24, 0
    %p233 = por %p231, %p232
    %s235 = sadd.s32 %s234, 1
    %p238 = scmp.eq.s32.totalorder %s18, 1
    %p239 = scmp.ne.s32.totalorder %s234, %s236
    %p240 = scmp.eq.s32.totalorder %s18, 0
    %p241 = por %p239, %p240
    %p242 = scmp.ne.s32.totalorder %s234, %s236
    %p243 = scmp.eq.s32.totalorder %s23, 1
    %p244 = por %p242, %p243
    %p245 = scmp.ne.s32.totalorder %s236, %s237
    %p246 = scmp.eq.s32.totalorder %s23, 0
    %p247 = por %p245, %p246
    %p248 = scmp.ne.s32.totalorder %s236, %s237
    %p249 = scmp.eq.s32.totalorder %s24, 1
    %p250 = por %p248, %p249
    %p252 = scmp.ne.s32.totalorder %s237, %s251
    %p253 = scmp.eq.s32.totalorder %s24, 0
    %p254 = por %p252, %p253
    %s256 = sadd.s32 %s255, 1
    %p259 = scmp.eq.s32.totalorder %s18, 1
    %p260 = scmp.ne.s32.totalorder %s255, %s257
    %p261 = scmp.eq.s32.totalorder %s18, 0
    %p262 = por %p260, %p261
    %p263 = scmp.ne.s32.totalorder %s255, %s257
    %p264 = scmp.eq.s32.totalorder %s23, 1
    %p265 = por %p263, %p264
    %p266 = scmp.ne.s32.totalorder %s257, %s258
    %p267 = scmp.eq.s32.totalorder %s23, 0
    %p268 = por %p266, %p267
    %p269 = scmp.ne.s32.totalorder %s257, %s258
    %p270 = scmp.eq.s32.totalorder %s24, 1
    %p271 = por %p269, %p270
    %p273 = scmp.ne.s32.totalorder %s258, %s272
    %p274 = scmp.eq.s32.totalorder %s24, 0
    %p275 = por %p273, %p274
    %s277 = sadd.s32 %s276, 1
    %p280 = scmp.eq.s32.totalorder %s18, 1
    %p281 = scmp.ne.s32.totalorder %s276, %s278
    %p282 = scmp.eq.s32.totalorder %s18, 0
    %p283 = por %p281, %p282
    %p284 = scmp.ne.s32.totalorder %s276, %s278
    %p285 = scmp.eq.s32.totalorder %s23, 1
    %p286 = por %p284, %p285
    %p287 = scmp.ne.s32.totalorder %s278, %s279
    %p288 = scmp.eq.s32.totalorder %s23, 0
    %p289 = por %p287, %p288
    %p290 = scmp.ne.s32.totalorder %s278, %s279
    %p291 = scmp.eq.s32.totalorder %s24, 1
    %p292 = por %p290, %p291
    %p294 = scmp.ne.s32.totalorder %s279, %s293
    %p295 = scmp.eq.s32.totalorder %s24, 0
    %p296 = por %p294, %p295
    %s297 = ssub.s32 %s25, %s37
    %s298 = ssub.s32 %s26, %s33
    %s299 = sor.u32 %s297, %s298
    %p300 = scmp.eq.s32.totalorder %s299, 0
    %s302 = sadd.s32 %s301, 1
    %s303 = scalar_select %p300, %s301, %s302
    %p306 = pneg %p300
    %p307 = scmp.eq.s32.totalorder %s18, 1
    %p308 = por %p306, %p307
    %p309 = scmp.ne.s32.totalorder %s301, %s304
    %p310 = scmp.eq.s32.totalorder %s18, 0
    %p311 = por %p309, %p310
    %p312 = scmp.ne.s32.totalorder %s301, %s304
    %p313 = scmp.eq.s32.totalorder %s23, 1
    %p314 = por %p312, %p313
    %p315 = scmp.ne.s32.totalorder %s304, %s305
    %p316 = scmp.eq.s32.totalorder %s23, 0
    %p317 = por %p315, %p316
    %p318 = scmp.ne.s32.totalorder %s304, %s305
    %p319 = scmp.eq.s32.totalorder %s24, 1
    %p320 = por %p318, %p319
    %p322 = scmp.ne.s32.totalorder %s305, %s321
    %p323 = scmp.eq.s32.totalorder %s24, 0
    %p324 = por %p322, %p323
    %p325 = scmp.le.s32.totalorder 1, %s18
    %p326 = scmp.lt.s32.totalorder %s18, 3
    %p327 = pnand %p325, %p326
    %p328 = pneg %p327
    // Predicated region
    $region9: #{bottleneck_forward.1} parent=5 // pred_check
      _
    $region10: #{bottleneck_forward.1} parent=5 // pred_check_branch
      %330 = sbr.rel (%p327) target = $region12
    $region11: #{bottleneck_forward.1} parent=5 // pred_region
      %s331 = ssub.s32 %s18, 1
      // Predicated region
      $region13: #{bottleneck_forward.1} parent=11 // pred_check
        %p332 = pneg %p79
      $region14: #{bottleneck_forward.1} parent=11 // pred_check_branch
        %334 = sbr.rel (%p332) target = $region16
      $region15: #{bottleneck_forward.1} parent=11 // pred_region
        _
      $region16: #{bottleneck_forward.1} parent=11 // pred_fallthru
        _
      // Predicated region
      $region17: #{bottleneck_forward.1} parent=11 // pred_check
        %p335 = pneg %p100
      $region18: #{bottleneck_forward.1} parent=11 // pred_check_branch
        %337 = sbr.rel (%p335) target = $region20
      $region19: #{bottleneck_forward.1} parent=11 // pred_region
        _
      $region20: #{bottleneck_forward.1} parent=11 // pred_fallthru
        _
      // Predicated region
      $region21: #{bottleneck_forward.1} parent=11 // pred_check
        %p338 = pneg %p121
      $region22: #{bottleneck_forward.1} parent=11 // pred_check_branch
        %340 = sbr.rel (%p338) target = $region24
      $region23: #{bottleneck_forward.1} parent=11 // pred_region
        _
      $region24: #{bottleneck_forward.1} parent=11 // pred_fallthru
        _
      // Predicated region
      $region25: #{bottleneck_forward.1} parent=11 // pred_check
        %p341 = pneg %p142
      $region26: #{bottleneck_forward.1} parent=11 // pred_check_branch
        %343 = sbr.rel (%p341) target = $region28
      $region27: #{bottleneck_forward.1} parent=11 // pred_region
        _
      $region28: #{bottleneck_forward.1} parent=11 // pred_fallthru
        _
      // Predicated region
      $region29: #{bottleneck_forward.1} parent=11 // pred_check
        %p344 = pneg %p163
      $region30: #{bottleneck_forward.1} parent=11 // pred_check_branch
        %346 = sbr.rel (%p344) target = $region32
      $region31: #{bottleneck_forward.1} parent=11 // pred_region
        _
      $region32: #{bottleneck_forward.1} parent=11 // pred_fallthru
        _
      // Predicated region
      $region33: #{bottleneck_forward.1} parent=11 // pred_check
        %p347 = pneg %p184
      $region34: #{bottleneck_forward.1} parent=11 // pred_check_branch
        %349 = sbr.rel (%p347) target = $region36
      $region35: #{bottleneck_forward.1} parent=11 // pred_region
        _
      $region36: #{bottleneck_forward.1} parent=11 // pred_fallthru
        _
      // Predicated region
      $region37: #{bottleneck_forward.1} parent=11 // pred_check
        %p350 = pneg %p205
      $region38: #{bottleneck_forward.1} parent=11 // pred_check_branch
        %352 = sbr.rel (%p350) target = $region40
      $region39: #{bottleneck_forward.1} parent=11 // pred_region
        _
      $region40: #{bottleneck_forward.1} parent=11 // pred_fallthru
        _
      // Predicated region
      $region41: #{bottleneck_forward.1} parent=11 // pred_check
        %p353 = pneg %p226
      $region42: #{bottleneck_forward.1} parent=11 // pred_check_branch
        %355 = sbr.rel (%p353) target = $region44
      $region43: #{bottleneck_forward.1} parent=11 // pred_region
        _
      $region44: #{bottleneck_forward.1} parent=11 // pred_fallthru
        _
      // Predicated region
      $region45: #{bottleneck_forward.1} parent=11 // pred_check
        %p356 = pneg %p247
      $region46: #{bottleneck_forward.1} parent=11 // pred_check_branch
        %358 = sbr.rel (%p356) target = $region48
      $region47: #{bottleneck_forward.1} parent=11 // pred_region
        _
      $region48: #{bottleneck_forward.1} parent=11 // pred_fallthru
        _
      // Predicated region
      $region49: #{bottleneck_forward.1} parent=11 // pred_check
        %p359 = pneg %p268
      $region50: #{bottleneck_forward.1} parent=11 // pred_check_branch
        %361 = sbr.rel (%p359) target = $region52
      $region51: #{bottleneck_forward.1} parent=11 // pred_region
        _
      $region52: #{bottleneck_forward.1} parent=11 // pred_fallthru
        _
      // Predicated region
      $region53: #{bottleneck_forward.1} parent=11 // pred_check
        %p362 = pneg %p289
      $region54: #{bottleneck_forward.1} parent=11 // pred_check_branch
        %364 = sbr.rel (%p362) target = $region56
      $region55: #{bottleneck_forward.1} parent=11 // pred_region
        _
      $region56: #{bottleneck_forward.1} parent=11 // pred_fallthru
        _
    $region12: #{bottleneck_forward.1} parent=5 // pred_fallthru
      _
    %p365 = scmp.lt.s32.totalorder %s18, 2
    // Predicated region
    $region57: #{bottleneck_forward.1} parent=5 // pred_check
      %p366 = pneg %p365
    $region58: #{bottleneck_forward.1} parent=5 // pred_check_branch
      %368 = sbr.rel (%p366) target = $region60
    $region59: #{bottleneck_forward.1} parent=5 // pred_region
      // Predicated region
      $region61: #{bottleneck_forward.1} parent=59 // pred_check
        %p369 = pneg %p52
      $region62: #{bottleneck_forward.1} parent=59 // pred_check_branch
        %371 = sbr.rel (%p369) target = $region64
      $region63: #{bottleneck_forward.1} parent=59 // pred_region
        %s372 = smul.u32 2, %s26
        %p373 = scmp.lt.s32.totalorder %s25, 1
        %s374 = scalar_select %p373, %s25, 1
        %p375 = scmp.lt.s32.totalorder %s372, 1
        %s376 = scalar_select %p375, %s372, 1
        %s377 = smul.addr %s374, 8
        %s378 = sadd.s32 %s376, %s377
        %s379 = smul.addr %s378, 8
        %s380 = scalar_lea.vmem %s0, %s379
        %s381 = smul.u32 2, %s26
      $region64: #{bottleneck_forward.1} parent=59 // pred_fallthru
        _
    $region60: #{bottleneck_forward.1} parent=5 // pred_fallthru
      _
    %p382 = scmp.le.s32.totalorder 1, %s18
    %p383 = scmp.lt.s32.totalorder %s18, 3
    %p384 = pnand %p382, %p383
    %p385 = pneg %p384
    // Predicated region
    $region65: #{bottleneck_forward.1} parent=5 // pred_check
      _
    $region66: #{bottleneck_forward.1} parent=5 // pred_check_branch
      %387 = sbr.rel (%p384) target = $region68
    $region67: #{bottleneck_forward.1} parent=5 // pred_region
      %s388 = ssub.s32 %s18, 1
      %s389 = smul.u32 2, %s28
      %p390 = scmp.lt.s32.totalorder %s27, 1
      %s391 = scalar_select %p390, %s27, 1
      %p392 = scmp.lt.s32.totalorder %s389, 1
      %s393 = scalar_select %p392, %s389, 1
      %s394 = smul.addr %s391, 8
      %s395 = sadd.s32 %s393, %s394
      %s396 = smul.addr %s395, 8
      %s397 = scalar_lea.vmem %s0, %s396
      %p398 = pneg %p58
      %p399 = pneg %p55
      %p400 = pneg %p79
      %p401 = pneg %p76
      %p402 = pneg %p100
      %p403 = pneg %p97
      %p404 = pneg %p121
      %p405 = pneg %p118
      %p406 = pneg %p142
      %p407 = pneg %p139
      %p408 = pneg %p163
      %p409 = pneg %p160
      %p410 = pneg %p184
      %p411 = pneg %p181
      %p412 = pneg %p205
      %p413 = pneg %p202
      %p414 = pneg %p226
      %p415 = pneg %p223
      %p416 = pneg %p247
      %p417 = pneg %p244
      %p418 = pneg %p268
      %p419 = pneg %p265
      %p420 = pneg %p289
      %p421 = pneg %p286
      %p422 = pneg %p317
      %p423 = pneg %p314
      %s424 = smul.u32 2, %s28
      %p425 = scmp.lt.s32.totalorder %s27, 1
      %s426 = scalar_select %p425, %s27, 1
      %p427 = scmp.lt.s32.totalorder %s424, 1
      %s428 = scalar_select %p427, %s424, 1
      %s429 = smul.addr %s426, 16
      %s430 = sadd.s32 %s428, %s429
      %s431 = smul.addr %s430, 8
      %s432 = scalar_lea.vmem %s12, %s431
      %s433 = smul.u32 2, %s28
      %p434 = scmp.lt.s32.totalorder %s27, 1
      %s435 = scalar_select %p434, %s27, 1
      %p436 = scmp.lt.s32.totalorder %s433, 1
      %s437 = scalar_select %p436, %s433, 1
      %s438 = smul.addr %s435, 8
      %s439 = sadd.s32 %s437, %s438
      %s440 = smul.addr %s439, 8
      %s441 = scalar_lea.vmem %s0, %s440
      %s442 = smul.u32 2, %s28
      %s443 = smul.u32 2, %s28
      %p444 = scmp.lt.s32.totalorder %s27, 1
      %s445 = scalar_select %p444, %s27, 1
      %p446 = scmp.lt.s32.totalorder %s443, 1
      %s447 = scalar_select %p446, %s443, 1
      %s448 = smul.addr %s445, 16
      %s449 = sadd.s32 %s447, %s448
      %s450 = smul.addr %s449, 8
      %s451 = scalar_lea.vmem %s12, %s450
      %s452 = smul.u32 2, %s28
      %v454 = vld [vmem:[%s441] sm:$0xff]
      %v455 = vld [vmem:[%s441 + $0x8] sm:$0xff]
      %v456 = vld [vmem:[%s441 + $0x10] sm:$0xff]
      %v457 = vld [vmem:[%s441 + $0x18] sm:$0xff]
      %v458 = vld [vmem:[%s441 + $0x20] sm:$0xff]
      %v459 = vld [vmem:[%s441 + $0x28] sm:$0xff]
      %v460 = vld [vmem:[%s441 + $0x30] sm:$0xff]
      %v461 = vld [vmem:[%s441 + $0x38] sm:$0xff]
      %v462 = vpack.c.bf16 %v456, %v454
      %v463 = vpack.c.bf16 %v457, %v455
      %v464 = vpack.c.bf16 %v460, %v458
      %v465 = vpack.c.bf16 %v461, %v459
      %v466 = vld [vmem:[%s1] sm:$0xf]
      %v467 = vld [vmem:[%s1 + $0x4] sm:$0xf]
      %v470 = vunpack.c.l.b16 %v466
      %v471 = vunpack.c.l.b16 %v467
      %v472 = vpack.c.b16 %v471, %v470
      %vm473 = vcmask 261120
      %v475 = vsel %vm473, %v472, 0
      %477 = vmatpush.bf16.msra.mxu0 0
      %478 = vmatpush.bf16.msra.mxu0 0
      %479 = vmatpush.bf16.msra.mxu0 0
      %480 = vmatpush.bf16.msra.mxu0 0
      %481 = vmatpush.bf16.msra.mxu0 0
      %482 = vmatpush.bf16.msra.mxu0 0
      %483 = vmatpush.bf16.msra.mxu0 %v464
      %484 = vmatpush.bf16.msra.mxu0 %v462
      %485 = vmatmul.bf16.gmra.mxu0 %v475
      %v486 = vpop.f32.mrf.mxu0
      %v487 = vadd.f32 0.0, %v486
      %v488 = vpop.f32.mrf.mxu0
      %v489 = vadd.f32 0.0, %v488
      %490 = vdwg.mxu0
      %491 = vmatpush.bf16.msra.mxu0 0
      %492 = vmatpush.bf16.msra.mxu0 0
      %493 = vmatpush.bf16.msra.mxu0 0
      %494 = vmatpush.bf16.msra.mxu0 0
      %495 = vmatpush.bf16.msra.mxu0 0
      %496 = vmatpush.bf16.msra.mxu0 0
      %497 = vmatpush.bf16.msra.mxu0 %v465
      %498 = vmatpush.bf16.msra.mxu0 %v463
      %499 = vmatmul.bf16.gmra.mxu0 %v475
      %v500 = vpop.f32.mrf.mxu0
      %v501 = vadd.f32 0.0, %v500
      %v502 = vpop.f32.mrf.mxu0
      %v503 = vadd.f32 0.0, %v502
      %504 = vdwg.mxu0
      %v505 = vld [vmem:[%s2] sm:$0xff]
      %v506 = vld [vmem:[%s2 + $0x8] sm:$0xff]
      %508 = vset.pattern.permute.xlu0 0
      %509 = vperm.xlu0 %508, %v505
      %v510 = vpop.permute.xlu0 %509
      %513 = vset.pattern.permute.xlu0 0
      %514 = vperm.xlu0 %513, %v506
      %v515 = vpop.permute.xlu0 %514
      %v517 = vmul.f32 %v487, %v510
      %v518 = vmul.f32 %v501, %v510
      %v519 = vmul.f32 %v489, %v515
      %v520 = vmul.f32 %v503, %v515
      %v521 = vld [vmem:[%s3] sm:$0xff]
      %v522 = vld [vmem:[%s3 + $0x8] sm:$0xff]
      %524 = vset.pattern.permute.xlu0 0
      %525 = vperm.xlu0 %524, %v521
      %v526 = vpop.permute.xlu0 %525
      %529 = vset.pattern.permute.xlu0 0
      %530 = vperm.xlu0 %529, %v522
      %v531 = vpop.permute.xlu0 %530
      %v533 = vadd.f32 %v517, %v526
      %v534 = vadd.f32 %v518, %v526
      %v535 = vadd.f32 %v519, %v531
      %v536 = vadd.f32 %v520, %v531
      %v537 = vmax.f32 %v533, 0.0
      %v538 = vmax.f32 %v534, 0.0
      %v539 = vmax.f32 %v535, 0.0
      %v540 = vmax.f32 %v536, 0.0
      %v541 = vld [vmem:[%s4] sm:$0xff]
      %v542 = vld [vmem:[%s4 + $0x8] sm:$0xff]
      %544 = vset.pattern.permute.xlu0 0
      %545 = vperm.xlu0 %544, %v541
      %v546 = vpop.permute.xlu0 %545
      %549 = vset.pattern.permute.xlu0 0
      %550 = vperm.xlu0 %549, %v542
      %v551 = vpop.permute.xlu0 %550
      %v553 = vmul.f32 %v537, %v546
      %v554 = vmul.f32 %v538, %v546
      %v555 = vmul.f32 %v539, %v551
      %v556 = vmul.f32 %v540, %v551
      %v557 = vld [vmem:[%s5] sm:$0xff]
      %v558 = vld [vmem:[%s5 + $0x8] sm:$0xff]
      %560 = vset.pattern.permute.xlu0 0
      %561 = vperm.xlu0 %560, %v557
      %v562 = vpop.permute.xlu0 %561
      %565 = vset.pattern.permute.xlu0 0
      %566 = vperm.xlu0 %565, %v558
      %v567 = vpop.permute.xlu0 %566
      %v569 = vadd.f32 %v553, %v562
      %v570 = vadd.f32 %v554, %v562
      %v571 = vadd.f32 %v555, %v567
      %v572 = vadd.f32 %v556, %v567
      %v573 = vmax.f32 %v569, 0.0
      %v574 = vmax.f32 %v570, 0.0
      %v575 = vmax.f32 %v571, 0.0
      %v576 = vmax.f32 %v572, 0.0
      %v577 = vld [vmem:[%s9] sm:$0xf]
      %v578 = vld [vmem:[%s9 + $0x4] sm:$0xf]
      %v579 = vld [vmem:[%s9 + $0x8] sm:$0xf]
      %v580 = vld [vmem:[%s9 + $0xc] sm:$0xf]
      %v581 = vld [vmem:[%s9 + $0x10] sm:$0xf]
      %v582 = vld [vmem:[%s9 + $0x14] sm:$0xf]
      %v583 = vld [vmem:[%s9 + $0x18] sm:$0xf]
      %v584 = vld [vmem:[%s9 + $0x1c] sm:$0xf]
      %v593 = vunpack.c.l.b16 %v577
      %v594 = vunpack.c.l.b16 %v578
      %v595 = vunpack.c.l.b16 %v579
      %v596 = vunpack.c.l.b16 %v580
      %v597 = vunpack.c.l.b16 %v581
      %v598 = vunpack.c.l.b16 %v582
      %v599 = vunpack.c.l.b16 %v583
      %v600 = vunpack.c.l.b16 %v584
      %v601 = vpack.c.b16 %v594, %v593
      %v602 = vpack.c.b16 %v596, %v595
      %v603 = vpack.c.b16 %v598, %v597
      %v604 = vpack.c.b16 %v600, %v599
      %v606 = vsel %vm473, %v601, 0
      %v609 = vsel %vm473, %v602, 0
      %v612 = vsel %vm473, %v603, 0
      %v615 = vsel %vm473, %v604, 0
      %617 = vmatpush.bf16.msra.mxu0 0
      %618 = vmatpush.bf16.msra.mxu0 0
      %619 = vmatpush.bf16.msra.mxu0 0
      %620 = vmatpush.bf16.msra.mxu0 0
      %621 = vmatpush.bf16.msra.mxu0 0
      %622 = vmatpush.bf16.msra.mxu0 0
      %623 = vmatpush.bf16.msra.mxu0 %v464
      %624 = vmatpush.bf16.msra.mxu0 %v462
      %625 = vmatmul.bf16.gmra.mxu0 %v606
      %v626 = vpop.f32.mrf.mxu0
      %v627 = vadd.f32 0.0, %v626
      %v628 = vpop.f32.mrf.mxu0
      %v629 = vadd.f32 0.0, %v628
      %630 = vmatmul.bf16.gmra.mxu0 %v609
      %v631 = vpop.f32.mrf.mxu0
      %v632 = vadd.f32 0.0, %v631
      %v633 = vpop.f32.mrf.mxu0
      %v634 = vadd.f32 0.0, %v633
      %635 = vmatmul.bf16.gmra.mxu0 %v612
      %v636 = vpop.f32.mrf.mxu0
      %v637 = vadd.f32 0.0, %v636
      %v638 = vpop.f32.mrf.mxu0
      %v639 = vadd.f32 0.0, %v638
      %640 = vmatmul.bf16.gmra.mxu0 %v615
      %v641 = vpop.f32.mrf.mxu0
      %v642 = vadd.f32 0.0, %v641
      %v643 = vpop.f32.mrf.mxu0
      %v644 = vadd.f32 0.0, %v643
      %645 = vdwg.mxu0
      %646 = vmatpush.bf16.msra.mxu0 0
      %647 = vmatpush.bf16.msra.mxu0 0
      %648 = vmatpush.bf16.msra.mxu0 0
      %649 = vmatpush.bf16.msra.mxu0 0
      %650 = vmatpush.bf16.msra.mxu0 0
      %651 = vmatpush.bf16.msra.mxu0 0
      %652 = vmatpush.bf16.msra.mxu0 %v465
      %653 = vmatpush.bf16.msra.mxu0 %v463
      %654 = vmatmul.bf16.gmra.mxu0 %v606
      %v655 = vpop.f32.mrf.mxu0
      %v656 = vadd.f32 0.0, %v655
      %v657 = vpop.f32.mrf.mxu0
      %v658 = vadd.f32 0.0, %v657
      %659 = vmatmul.bf16.gmra.mxu0 %v609
      %v660 = vpop.f32.mrf.mxu0
      %v661 = vadd.f32 0.0, %v660
      %v662 = vpop.f32.mrf.mxu0
      %v663 = vadd.f32 0.0, %v662
      %664 = vmatmul.bf16.gmra.mxu0 %v612
      %v665 = vpop.f32.mrf.mxu0
      %v666 = vadd.f32 0.0, %v665
      %v667 = vpop.f32.mrf.mxu0
      %v668 = vadd.f32 0.0, %v667
      %669 = vmatmul.bf16.gmra.mxu0 %v615
      %v670 = vpop.f32.mrf.mxu0
      %v671 = vadd.f32 0.0, %v670
      %v672 = vpop.f32.mrf.mxu0
      %v673 = vadd.f32 0.0, %v672
      %674 = vdwg.mxu0
      %v675 = vld [vmem:[%s10] sm:$0xff]
      %v676 = vld [vmem:[%s10 + $0x8] sm:$0xff]
      %v677 = vld [vmem:[%s10 + $0x10] sm:$0xff]
      %v678 = vld [vmem:[%s10 + $0x18] sm:$0xff]
      %v679 = vld [vmem:[%s10 + $0x20] sm:$0xff]
      %v680 = vld [vmem:[%s10 + $0x28] sm:$0xff]
      %v681 = vld [vmem:[%s10 + $0x30] sm:$0xff]
      %v682 = vld [vmem:[%s10 + $0x38] sm:$0xff]
      %684 = vset.pattern.permute.xlu0 0
      %685 = vperm.xlu0 %684, %v675
      %v686 = vpop.permute.xlu0 %685
      %689 = vset.pattern.permute.xlu0 0
      %690 = vperm.xlu0 %689, %v676
      %v691 = vpop.permute.xlu0 %690
      %694 = vset.pattern.permute.xlu0 0
      %695 = vperm.xlu0 %694, %v677
      %v696 = vpop.permute.xlu0 %695
      %699 = vset.pattern.permute.xlu0 0
      %700 = vperm.xlu0 %699, %v678
      %v701 = vpop.permute.xlu0 %700
      %704 = vset.pattern.permute.xlu0 0
      %705 = vperm.xlu0 %704, %v679
      %v706 = vpop.permute.xlu0 %705
      %709 = vset.pattern.permute.xlu0 0
      %710 = vperm.xlu0 %709, %v680
      %v711 = vpop.permute.xlu0 %710
      %714 = vset.pattern.permute.xlu0 0
      %715 = vperm.xlu0 %714, %v681
      %v716 = vpop.permute.xlu0 %715
      %719 = vset.pattern.permute.xlu0 0
      %720 = vperm.xlu0 %719, %v682
      %v721 = vpop.permute.xlu0 %720
      %v723 = vmul.f32 %v627, %v686
      %v724 = vmul.f32 %v656, %v686
      %v725 = vmul.f32 %v629, %v691
      %v726 = vmul.f32 %v658, %v691
      %v727 = vmul.f32 %v632, %v696
      %v728 = vmul.f32 %v661, %v696
      %v729 = vmul.f32 %v634, %v701
      %v730 = vmul.f32 %v663, %v701
      %v731 = vmul.f32 %v637, %v706
      %v732 = vmul.f32 %v666, %v706
      %v733 = vmul.f32 %v639, %v711
      %v734 = vmul.f32 %v668, %v711
      %v735 = vmul.f32 %v642, %v716
      %v736 = vmul.f32 %v671, %v716
      %v737 = vmul.f32 %v644, %v721
      %v738 = vmul.f32 %v673, %v721
      %v739 = vld [vmem:[%s11] sm:$0xff]
      %v740 = vld [vmem:[%s11 + $0x8] sm:$0xff]
      %v741 = vld [vmem:[%s11 + $0x10] sm:$0xff]
      %v742 = vld [vmem:[%s11 + $0x18] sm:$0xff]
      %v743 = vld [vmem:[%s11 + $0x20] sm:$0xff]
      %v744 = vld [vmem:[%s11 + $0x28] sm:$0xff]
      %v745 = vld [vmem:[%s11 + $0x30] sm:$0xff]
      %v746 = vld [vmem:[%s11 + $0x38] sm:$0xff]
      %748 = vset.pattern.permute.xlu0 0
      %749 = vperm.xlu0 %748, %v739
      %v750 = vpop.permute.xlu0 %749
      %753 = vset.pattern.permute.xlu0 0
      %754 = vperm.xlu0 %753, %v740
      %v755 = vpop.permute.xlu0 %754
      %758 = vset.pattern.permute.xlu0 0
      %759 = vperm.xlu0 %758, %v741
      %v760 = vpop.permute.xlu0 %759
      %763 = vset.pattern.permute.xlu0 0
      %764 = vperm.xlu0 %763, %v742
      %v765 = vpop.permute.xlu0 %764
      %768 = vset.pattern.permute.xlu0 0
      %769 = vperm.xlu0 %768, %v743
      %v770 = vpop.permute.xlu0 %769
      %773 = vset.pattern.permute.xlu0 0
      %774 = vperm.xlu0 %773, %v744
      %v775 = vpop.permute.xlu0 %774
      %778 = vset.pattern.permute.xlu0 0
      %779 = vperm.xlu0 %778, %v745
      %v780 = vpop.permute.xlu0 %779
      %783 = vset.pattern.permute.xlu0 0
      %784 = vperm.xlu0 %783, %v746
      %v785 = vpop.permute.xlu0 %784
      %v787 = vadd.f32 %v723, %v750
      %v788 = vadd.f32 %v724, %v750
      %v789 = vadd.f32 %v725, %v755
      %v790 = vadd.f32 %v726, %v755
      %v791 = vadd.f32 %v727, %v760
      %v792 = vadd.f32 %v728, %v760
      %v793 = vadd.f32 %v729, %v765
      %v794 = vadd.f32 %v730, %v765
      %v795 = vadd.f32 %v731, %v770
      %v796 = vadd.f32 %v732, %v770
      %v797 = vadd.f32 %v733, %v775
      %v798 = vadd.f32 %v734, %v775
      %v799 = vadd.f32 %v735, %v780
      %v800 = vadd.f32 %v736, %v780
      %v801 = vadd.f32 %v737, %v785
      %v802 = vadd.f32 %v738, %v785
      %v803 = vpack.c.bf16 %v574, %v573
      %v804 = vpack.c.bf16 %v576, %v575
      %v805 = vunpack.c.l.bf16 %v803
      %v806 = vunpack.c.h.bf16 %v803
      %v807 = vunpack.c.l.bf16 %v804
      %v808 = vunpack.c.h.bf16 %v804
      %v809 = vsub.f32 %v573, %v805
      %v810 = vsub.f32 %v574, %v806
      %v811 = vsub.f32 %v575, %v807
      %v812 = vsub.f32 %v576, %v808
      %v813 = vpack.c.bf16 %v811, %v809
      %v814 = vpack.c.bf16 %v812, %v810
      %v815 = vld [vmem:[%s6] sm:$0xf]
      %v816 = vld [vmem:[%s6 + $0x4] sm:$0xf]
      %v817 = vld [vmem:[%s6 + $0x8] sm:$0xf]
      %v818 = vld [vmem:[%s6 + $0xc] sm:$0xf]
      %v819 = vld [vmem:[%s6 + $0x10] sm:$0xf]
      %v820 = vld [vmem:[%s6 + $0x14] sm:$0xf]
      %v821 = vld [vmem:[%s6 + $0x18] sm:$0xf]
      %v822 = vld [vmem:[%s6 + $0x1c] sm:$0xf]
      %v831 = vunpack.c.l.b16 %v815
      %v832 = vunpack.c.l.b16 %v816
      %v833 = vunpack.c.l.b16 %v817
      %v834 = vunpack.c.l.b16 %v818
      %v835 = vunpack.c.l.b16 %v819
      %v836 = vunpack.c.l.b16 %v820
      %v837 = vunpack.c.l.b16 %v821
      %v838 = vunpack.c.l.b16 %v822
      %v839 = vpack.c.b16 %v832, %v831
      %v840 = vpack.c.b16 %v834, %v833
      %v841 = vpack.c.b16 %v836, %v835
      %v842 = vpack.c.b16 %v838, %v837
      %vm843 = vcmask 130048
      %v845 = vsel %vm843, %v839, 0
      %v848 = vsel %vm843, %v840, 0
      %v851 = vsel %vm843, %v841, 0
      %v854 = vsel %vm843, %v842, 0
      %856 = vmatpush.bf16.msra.mxu0 0
      %857 = vmatpush.bf16.msra.mxu0 0
      %858 = vmatpush.bf16.msra.mxu0 0
      %859 = vmatpush.bf16.msra.mxu0 0
      %860 = vmatpush.bf16.msra.mxu0 0
      %861 = vmatpush.bf16.msra.mxu0 0
      %862 = vmatpush.bf16.msra.mxu0 0
      %863 = vmatpush.bf16.msra.mxu0 %v813
      %864 = vmatmul.bf16.gmra.mxu0 %v845
      %v865 = vpop.f32.mrf.mxu0
      %v866 = vadd.f32 0.0, %v865
      %v867 = vpop.f32.mrf.mxu0
      %v868 = vadd.f32 0.0, %v867
      %869 = vmatmul.bf16.gmra.mxu0 %v848
      %v870 = vpop.f32.mrf.mxu0
      %v871 = vadd.f32 0.0, %v870
      %v872 = vpop.f32.mrf.mxu0
      %v873 = vadd.f32 0.0, %v872
      %874 = vmatmul.bf16.gmra.mxu0 %v851
      %v875 = vpop.f32.mrf.mxu0
      %v876 = vadd.f32 0.0, %v875
      %v877 = vpop.f32.mrf.mxu0
      %v878 = vadd.f32 0.0, %v877
      %879 = vmatmul.bf16.gmra.mxu0 %v854
      %v880 = vpop.f32.mrf.mxu0
      %v881 = vadd.f32 0.0, %v880
      %v882 = vpop.f32.mrf.mxu0
      %v883 = vadd.f32 0.0, %v882
      %884 = vdwg.mxu0
      %885 = vmatpush.bf16.msra.mxu0 0
      %886 = vmatpush.bf16.msra.mxu0 0
      %887 = vmatpush.bf16.msra.mxu0 0
      %888 = vmatpush.bf16.msra.mxu0 0
      %889 = vmatpush.bf16.msra.mxu0 0
      %890 = vmatpush.bf16.msra.mxu0 0
      %891 = vmatpush.bf16.msra.mxu0 0
      %892 = vmatpush.bf16.msra.mxu0 %v814
      %893 = vmatmul.bf16.gmra.mxu0 %v845
      %v894 = vpop.f32.mrf.mxu0
      %v895 = vadd.f32 0.0, %v894
      %v896 = vpop.f32.mrf.mxu0
      %v897 = vadd.f32 0.0, %v896
      %898 = vmatmul.bf16.gmra.mxu0 %v848
      %v899 = vpop.f32.mrf.mxu0
      %v900 = vadd.f32 0.0, %v899
      %v901 = vpop.f32.mrf.mxu0
      %v902 = vadd.f32 0.0, %v901
      %903 = vmatmul.bf16.gmra.mxu0 %v851
      %v904 = vpop.f32.mrf.mxu0
      %v905 = vadd.f32 0.0, %v904
      %v906 = vpop.f32.mrf.mxu0
      %v907 = vadd.f32 0.0, %v906
      %908 = vmatmul.bf16.gmra.mxu0 %v854
      %v909 = vpop.f32.mrf.mxu0
      %v910 = vadd.f32 0.0, %v909
      %v911 = vpop.f32.mrf.mxu0
      %v912 = vadd.f32 0.0, %v911
      %913 = vdwg.mxu0
      %v916 = vunpack.c.l.b16 %v803
      %v917 = vunpack.c.h.b16 %v803
      %v918 = vunpack.c.l.b16 %v804
      %v919 = vunpack.c.h.b16 %v804
      %v920 = vpack.c.b16 %v918, %v916
      %v921 = vpack.c.b16 %v919, %v917
      %924 = vmatpush.bf16.msra.mxu0 0
      %925 = vmatpush.bf16.msra.mxu0 0
      %926 = vmatpush.bf16.msra.mxu0 0
      %927 = vmatpush.bf16.msra.mxu0 0
      %928 = vmatpush.bf16.msra.mxu0 0
      %929 = vmatpush.bf16.msra.mxu0 0
      %930 = vmatpush.bf16.msra.mxu0 0
      %931 = vmatpush.bf16.msra.mxu0 %v920
      %932 = vmatmul.bf16.gmra.mxu0 %v845
      %v933 = vpop.f32.mrf.mxu0
      %v934 = vadd.f32 %v866, %v933
      %v935 = vpop.f32.mrf.mxu0
      %v936 = vadd.f32 %v868, %v935
      %937 = vmatmul.bf16.gmra.mxu0 %v848
      %v938 = vpop.f32.mrf.mxu0
      %v939 = vadd.f32 %v871, %v938
      %v940 = vpop.f32.mrf.mxu0
      %v941 = vadd.f32 %v873, %v940
      %942 = vmatmul.bf16.gmra.mxu0 %v851
      %v943 = vpop.f32.mrf.mxu0
      %v944 = vadd.f32 %v876, %v943
      %v945 = vpop.f32.mrf.mxu0
      %v946 = vadd.f32 %v878, %v945
      %947 = vmatmul.bf16.gmra.mxu0 %v854
      %v948 = vpop.f32.mrf.mxu0
      %v949 = vadd.f32 %v881, %v948
      %v950 = vpop.f32.mrf.mxu0
      %v951 = vadd.f32 %v883, %v950
      %952 = vdwg.mxu0
      %953 = vmatpush.bf16.msra.mxu0 0
      %954 = vmatpush.bf16.msra.mxu0 0
      %955 = vmatpush.bf16.msra.mxu0 0
      %956 = vmatpush.bf16.msra.mxu0 0
      %957 = vmatpush.bf16.msra.mxu0 0
      %958 = vmatpush.bf16.msra.mxu0 0
      %959 = vmatpush.bf16.msra.mxu0 0
      %960 = vmatpush.bf16.msra.mxu0 %v921
      %961 = vmatmul.bf16.gmra.mxu0 %v845
      %v962 = vpop.f32.mrf.mxu0
      %v963 = vadd.f32 %v895, %v962
      %v964 = vpop.f32.mrf.mxu0
      %v965 = vadd.f32 %v897, %v964
      %966 = vmatmul.bf16.gmra.mxu0 %v848
      %v967 = vpop.f32.mrf.mxu0
      %v968 = vadd.f32 %v900, %v967
      %v969 = vpop.f32.mrf.mxu0
      %v970 = vadd.f32 %v902, %v969
      %971 = vmatmul.bf16.gmra.mxu0 %v851
      %v972 = vpop.f32.mrf.mxu0
      %v973 = vadd.f32 %v905, %v972
      %v974 = vpop.f32.mrf.mxu0
      %v975 = vadd.f32 %v907, %v974
      %976 = vmatmul.bf16.gmra.mxu0 %v854
      %v977 = vpop.f32.mrf.mxu0
      %v978 = vadd.f32 %v910, %v977
      %v979 = vpop.f32.mrf.mxu0
      %v980 = vadd.f32 %v912, %v979
      %981 = vdwg.mxu0
      %v982 = vld [vmem:[%s7] sm:$0xff]
      %v983 = vld [vmem:[%s7 + $0x8] sm:$0xff]
      %v984 = vld [vmem:[%s7 + $0x10] sm:$0xff]
      %v985 = vld [vmem:[%s7 + $0x18] sm:$0xff]
      %v986 = vld [vmem:[%s7 + $0x20] sm:$0xff]
      %v987 = vld [vmem:[%s7 + $0x28] sm:$0xff]
      %v988 = vld [vmem:[%s7 + $0x30] sm:$0xff]
      %v989 = vld [vmem:[%s7 + $0x38] sm:$0xff]
      %991 = vset.pattern.permute.xlu0 0
      %992 = vperm.xlu0 %991, %v982
      %v993 = vpop.permute.xlu0 %992
      %996 = vset.pattern.permute.xlu0 0
      %997 = vperm.xlu0 %996, %v983
      %v998 = vpop.permute.xlu0 %997
      %1001 = vset.pattern.permute.xlu0 0
      %1002 = vperm.xlu0 %1001, %v984
      %v1003 = vpop.permute.xlu0 %1002
      %1006 = vset.pattern.permute.xlu0 0
      %1007 = vperm.xlu0 %1006, %v985
      %v1008 = vpop.permute.xlu0 %1007
      %1011 = vset.pattern.permute.xlu0 0
      %1012 = vperm.xlu0 %1011, %v986
      %v1013 = vpop.permute.xlu0 %1012
      %1016 = vset.pattern.permute.xlu0 0
      %1017 = vperm.xlu0 %1016, %v987
      %v1018 = vpop.permute.xlu0 %1017
      %1021 = vset.pattern.permute.xlu0 0
      %1022 = vperm.xlu0 %1021, %v988
      %v1023 = vpop.permute.xlu0 %1022
      %1026 = vset.pattern.permute.xlu0 0
      %1027 = vperm.xlu0 %1026, %v989
      %v1028 = vpop.permute.xlu0 %1027
      %v1030 = vmul.f32 %v934, %v993
      %v1031 = vmul.f32 %v963, %v993
      %v1032 = vmul.f32 %v936, %v998
      %v1033 = vmul.f32 %v965, %v998
      %v1034 = vmul.f32 %v939, %v1003
      %v1035 = vmul.f32 %v968, %v1003
      %v1036 = vmul.f32 %v941, %v1008
      %v1037 = vmul.f32 %v970, %v1008
      %v1038 = vmul.f32 %v944, %v1013
      %v1039 = vmul.f32 %v973, %v1013
      %v1040 = vmul.f32 %v946, %v1018
      %v1041 = vmul.f32 %v975, %v1018
      %v1042 = vmul.f32 %v949, %v1023
      %v1043 = vmul.f32 %v978, %v1023
      %v1044 = vmul.f32 %v951, %v1028
      %v1045 = vmul.f32 %v980, %v1028
      %v1046 = vld [vmem:[%s8] sm:$0xff]
      %v1047 = vld [vmem:[%s8 + $0x8] sm:$0xff]
      %v1048 = vld [vmem:[%s8 + $0x10] sm:$0xff]
      %v1049 = vld [vmem:[%s8 + $0x18] sm:$0xff]
      %v1050 = vld [vmem:[%s8 + $0x20] sm:$0xff]
      %v1051 = vld [vmem:[%s8 + $0x28] sm:$0xff]
      %v1052 = vld [vmem:[%s8 + $0x30] sm:$0xff]
      %v1053 = vld [vmem:[%s8 + $0x38] sm:$0xff]
      %1055 = vset.pattern.permute.xlu0 0
      %1056 = vperm.xlu0 %1055, %v1046
      %v1057 = vpop.permute.xlu0 %1056
      %1060 = vset.pattern.permute.xlu0 0
      %1061 = vperm.xlu0 %1060, %v1047
      %v1062 = vpop.permute.xlu0 %1061
      %1065 = vset.pattern.permute.xlu0 0
      %1066 = vperm.xlu0 %1065, %v1048
      %v1067 = vpop.permute.xlu0 %1066
      %1070 = vset.pattern.permute.xlu0 0
      %1071 = vperm.xlu0 %1070, %v1049
      %v1072 = vpop.permute.xlu0 %1071
      %1075 = vset.pattern.permute.xlu0 0
      %1076 = vperm.xlu0 %1075, %v1050
      %v1077 = vpop.permute.xlu0 %1076
      %1080 = vset.pattern.permute.xlu0 0
      %1081 = vperm.xlu0 %1080, %v1051
      %v1082 = vpop.permute.xlu0 %1081
      %1085 = vset.pattern.permute.xlu0 0
      %1086 = vperm.xlu0 %1085, %v1052
      %v1087 = vpop.permute.xlu0 %1086
      %1090 = vset.pattern.permute.xlu0 0
      %1091 = vperm.xlu0 %1090, %v1053
      %v1092 = vpop.permute.xlu0 %1091
      %v1094 = vadd.f32 %v1030, %v1057
      %v1095 = vadd.f32 %v1031, %v1057
      %v1096 = vadd.f32 %v1032, %v1062
      %v1097 = vadd.f32 %v1033, %v1062
      %v1098 = vadd.f32 %v1034, %v1067
      %v1099 = vadd.f32 %v1035, %v1067
      %v1100 = vadd.f32 %v1036, %v1072
      %v1101 = vadd.f32 %v1037, %v1072
      %v1102 = vadd.f32 %v1038, %v1077
      %v1103 = vadd.f32 %v1039, %v1077
      %v1104 = vadd.f32 %v1040, %v1082
      %v1105 = vadd.f32 %v1041, %v1082
      %v1106 = vadd.f32 %v1042, %v1087
      %v1107 = vadd.f32 %v1043, %v1087
      %v1108 = vadd.f32 %v1044, %v1092
      %v1109 = vadd.f32 %v1045, %v1092
      %v1110 = vadd.f32 %v1094, %v787
      %v1111 = vadd.f32 %v1095, %v788
      %v1112 = vadd.f32 %v1096, %v789
      %v1113 = vadd.f32 %v1097, %v790
      %v1114 = vadd.f32 %v1098, %v791
      %v1115 = vadd.f32 %v1099, %v792
      %v1116 = vadd.f32 %v1100, %v793
      %v1117 = vadd.f32 %v1101, %v794
      %v1118 = vadd.f32 %v1102, %v795
      %v1119 = vadd.f32 %v1103, %v796
      %v1120 = vadd.f32 %v1104, %v797
      %v1121 = vadd.f32 %v1105, %v798
      %v1122 = vadd.f32 %v1106, %v799
      %v1123 = vadd.f32 %v1107, %v800
      %v1124 = vadd.f32 %v1108, %v801
      %v1125 = vadd.f32 %v1109, %v802
      %v1126 = vmax.f32 %v1110, 0.0
      %v1127 = vmax.f32 %v1111, 0.0
      %v1128 = vmax.f32 %v1112, 0.0
      %v1129 = vmax.f32 %v1113, 0.0
      %v1130 = vmax.f32 %v1114, 0.0
      %v1131 = vmax.f32 %v1115, 0.0
      %v1132 = vmax.f32 %v1116, 0.0
      %v1133 = vmax.f32 %v1117, 0.0
      %v1134 = vmax.f32 %v1118, 0.0
      %v1135 = vmax.f32 %v1119, 0.0
      %v1136 = vmax.f32 %v1120, 0.0
      %v1137 = vmax.f32 %v1121, 0.0
      %v1138 = vmax.f32 %v1122, 0.0
      %v1139 = vmax.f32 %v1123, 0.0
      %v1140 = vmax.f32 %v1124, 0.0
      %v1141 = vmax.f32 %v1125, 0.0
      %1142 = vst [vmem:[%s451] sm:$0xff] %v1126
      %1143 = vst [vmem:[%s451 + $0x8] sm:$0xff] %v1127
      %1144 = vst [vmem:[%s451 + $0x10] sm:$0xff] %v1128
      %1145 = vst [vmem:[%s451 + $0x18] sm:$0xff] %v1129
      %1146 = vst [vmem:[%s451 + $0x20] sm:$0xff] %v1130
      %1147 = vst [vmem:[%s451 + $0x28] sm:$0xff] %v1131
      %1148 = vst [vmem:[%s451 + $0x30] sm:$0xff] %v1132
      %1149 = vst [vmem:[%s451 + $0x38] sm:$0xff] %v1133
      %1150 = vst [vmem:[%s451 + $0x40] sm:$0xff] %v1134
      %1151 = vst [vmem:[%s451 + $0x48] sm:$0xff] %v1135
      %1152 = vst [vmem:[%s451 + $0x50] sm:$0xff] %v1136
      %1153 = vst [vmem:[%s451 + $0x58] sm:$0xff] %v1137
      %1154 = vst [vmem:[%s451 + $0x60] sm:$0xff] %v1138
      %1155 = vst [vmem:[%s451 + $0x68] sm:$0xff] %v1139
      %1156 = vst [vmem:[%s451 + $0x70] sm:$0xff] %v1140
      %1157 = vst [vmem:[%s451 + $0x78] sm:$0xff] %v1141
      %s1158 = smul.u32 2, %s28
      %p1159 = scmp.lt.s32.totalorder %s27, 1
      %s1160 = scalar_select %p1159, %s27, 1
      %p1161 = scmp.lt.s32.totalorder %s1158, 1
      %s1162 = scalar_select %p1161, %s1158, 1
      %s1163 = smul.addr %s1160, 16
      %s1164 = sadd.s32 %s1162, %s1163
      %s1165 = smul.addr %s1164, 8
      %s1166 = scalar_lea.vmem %s12, %s1165
      // Predicated region
      $region69: #{bottleneck_forward.1} parent=67 // pred_check
        %p1167 = pneg %p314
      $region70: #{bottleneck_forward.1} parent=67 // pred_check_branch
        %1169 = sbr.rel (%p1167) target = $region72
      $region71: #{bottleneck_forward.1} parent=67 // pred_region
        %s1170 = smul.u32 2, %s28
      $region72: #{bottleneck_forward.1} parent=67 // pred_fallthru
        _
    $region68: #{bottleneck_forward.1} parent=5 // pred_fallthru
      _
    %p1171 = scmp.le.s32.totalorder 2, %s18
    // Predicated region
    $region73: #{bottleneck_forward.1} parent=5 // pred_check
      %p1172 = pneg %p1171
    $region74: #{bottleneck_forward.1} parent=5 // pred_check_branch
      %1174 = sbr.rel (%p1172) target = $region76
    $region75: #{bottleneck_forward.1} parent=5 // pred_region
      %s1175 = ssub.s32 %s18, 2
      // Predicated region
      $region77: #{bottleneck_forward.1} parent=75 // pred_check
        %p1176 = pneg %p320
      $region78: #{bottleneck_forward.1} parent=75 // pred_check_branch
        %1178 = sbr.rel (%p1176) target = $region80
      $region79: #{bottleneck_forward.1} parent=75 // pred_region
        %s1179 = smul.u32 2, %s30
        %p1180 = scmp.lt.s32.totalorder %s29, 1
        %s1181 = scalar_select %p1180, %s29, 1
        %p1182 = scmp.lt.s32.totalorder %s1179, 1
        %s1183 = scalar_select %p1182, %s1179, 1
        %s1184 = smul.addr %s1181, 16
        %s1185 = sadd.s32 %s1183, %s1184
        %s1186 = smul.addr %s1185, 8
        %s1187 = scalar_lea.vmem %s12, %s1186
      $region80: #{bottleneck_forward.1} parent=75 // pred_fallthru
        _
    $region76: #{bottleneck_forward.1} parent=5 // pred_fallthru
      _
  $region6: #{bottleneck_forward.1} parent=0 // loop_footer
    %s22 = sadd.s32 1, %s18
  $region7: #{bottleneck_forward.1} parent=0 // loop_footer_branch
    %17 = sbr.rel target = $region3
  $region8: #{bottleneck_forward.1} parent=0 // loop_exit
    _

</llo_original>
